<compile_context>
chip_gen: v7x
topology: tpu7x:2x2x1
jax: 0.10.0
libtpu: 0.0.40
codegen_flags: <defaults>
</compile_context>

<pallas_src>
import math
import functools

import jax
import jax.numpy as jnp
from jax import lax
from jax.experimental import pallas as pl
from jax.experimental.pallas import tpu as pltpu


# ---------------------------------------------------------------------------
# Kernel A: per-head K / V projections  ->  (B, H, S, d_h) bf16
# ---------------------------------------------------------------------------
def _kv_proj_kernel(k_ref, v_ref, wk_ref, bk_ref, wv_ref, bv_ref,
                    kp_ref, vp_ref):
    k = k_ref[0].astype(jnp.bfloat16)          # (tr, D)
    v = v_ref[0].astype(jnp.bfloat16)          # (tr, D)
    kp = jnp.dot(k, wk_ref[0], preferred_element_type=jnp.float32) + bk_ref[0]
    vp = jnp.dot(v, wv_ref[0], preferred_element_type=jnp.float32) + bv_ref[0]
    kp_ref[0, 0] = kp.astype(kp_ref.dtype)     # (tr, d_h)
    vp_ref[0, 0] = vp.astype(vp_ref.dtype)


# ---------------------------------------------------------------------------
# Kernel B: fused Q projection + flash attention + output projection
# grid = (B, q_tiles, heads, kv_tiles)
# ---------------------------------------------------------------------------
def _flash_attn_kernel(q_ref, wq_ref, bq_ref, kp_ref, vp_ref, bias_ref,
                       wo_ref, bo_ref, out_ref,
                       qp_sc, m_sc, l_sc, acc_sc, oacc_sc, *, scale):
    h = pl.program_id(2)
    kv = pl.program_id(3)
    last_h = pl.num_programs(2) - 1
    last_kv = pl.num_programs(3) - 1

    @pl.when(jnp.logical_and(kv == 0, h == 0))
    def _():
        # output-projection accumulator (summed over heads)
        oacc_sc[...] = jnp.zeros(oacc_sc.shape, jnp.float32)

    @pl.when(kv == 0)
    def _():
        # per-head Q projection (scale folded in), reset online-softmax state
        q = q_ref[0].astype(jnp.bfloat16)                       # (tq, D)
        qp = jnp.dot(q, wq_ref[0],
                     preferred_element_type=jnp.float32) + bq_ref[0]
        qp_sc[...] = (qp * scale).astype(jnp.bfloat16)          # (tq, d_h)
        m_sc[...] = jnp.full(m_sc.shape, -1e30, jnp.float32)
        l_sc[...] = jnp.zeros(l_sc.shape, jnp.float32)
        acc_sc[...] = jnp.zeros(acc_sc.shape, jnp.float32)

    kp = kp_ref[0, 0]                                           # (tk, d_h) bf16
    vp = vp_ref[0, 0]                                           # (tk, d_h) bf16

    # scores = (q*scale) . k^T, contraction over d_h (no materialised transpose)
    s = lax.dot_general(qp_sc[...], kp, (((1,), (1,)), ((), ())),
                        preferred_element_type=jnp.float32)     # (tq, tk)
    s = s + bias_ref[0].astype(jnp.float32)                     # additive mask

    m_prev = m_sc[...]
    m_new = jnp.maximum(m_prev, jnp.max(s, axis=-1, keepdims=True))
    alpha = jnp.exp(m_prev - m_new)
    p = jnp.exp(s - m_new)
    l_sc[...] = alpha * l_sc[...] + jnp.sum(p, axis=-1, keepdims=True)
    acc_sc[...] = alpha * acc_sc[...] + jnp.dot(
        p.astype(jnp.bfloat16), vp, preferred_element_type=jnp.float32)
    m_sc[...] = m_new

    @pl.when(kv == last_kv)
    def _():
        # finalize this head's context and fold it into the output projection
        ctx = acc_sc[...] * pl.reciprocal(l_sc[...], approx=True)   # (tq, d_h)
        oacc_sc[...] += jnp.dot(ctx.astype(jnp.bfloat16), wo_ref[0],
                                preferred_element_type=jnp.float32)  # (tq, D)

    @pl.when(jnp.logical_and(kv == last_kv, h == last_h))
    def _():
        out_ref[0] = (oacc_sc[...] + bo_ref[...]).astype(out_ref.dtype)


# ---------------------------------------------------------------------------
# Wrapper
# ---------------------------------------------------------------------------
def _pick_tile(S, pref, mult):
    """Largest tile <= pref that divides S and is a multiple of `mult`,
    falling back to the full dimension (always legal)."""
    if S <= pref:
        return S
    t = (pref // mult) * mult
    while t >= mult:
        if S % t == 0:
            return t
        t -= mult
    return S


def multi_head_attention(Q, K, V, attn_mask, params, *, n_heads):
    """Q,K,V: (B, S, D) f32. attn_mask: (B, S, S), 0 == masked out."""
    B, S, D = Q.shape
    assert D % n_heads == 0, "d_model must be divisible by n_heads"
    H = n_heads
    d_h = D // H
    f32, bf16 = jnp.float32, jnp.bfloat16

    # -------- host-side weight re-layout (free) --------
    def head_cols(W):                    # nn.Linear weight (D_out, D_in)
        Wt = W.astype(f32).T             # (D_in, D_out):  x @ Wt == x @ W.T
        return Wt.reshape(D, H, d_h).transpose(1, 0, 2).astype(bf16)  # (H,D,d_h)

    WqH = head_cols(params["W_Q"])
    WkH = head_cols(params["W_K"])
    WvH = head_cols(params["W_V"])
    WoH = params["W_O"].astype(f32).T.reshape(H, d_h, D).astype(bf16)  # (H,d_h,D)

    bqH = params["b_Q"].astype(f32).reshape(H, 1, d_h)
    bkH = params["b_K"].astype(f32).reshape(H, 1, d_h)
    bvH = params["b_V"].astype(f32).reshape(H, 1, d_h)
    bo = params["b_O"].astype(f32).reshape(1, D)

    # additive mask bias (bf16: half the DMA; exact 0 for unmasked entries)
    bias = jnp.where(attn_mask == 0, f32(-1e9), f32(0.0)).astype(bf16)

    tr = _pick_tile(S, 256, 8)      # projection row tile
    tq = _pick_tile(S, 256, 8)      # query tile
    tk = _pick_tile(S, 512, 128)    # kv tile (lane dim of the mask block)
    n_r, n_q, n_kv = S // tr, S // tq, S // tk
    scale = 1.0 / math.sqrt(d_h)

    # -------- Kernel A: K/V projections, head-major bf16 output --------
    Kp, Vp = pl.pallas_call(
        _kv_proj_kernel,
        out_shape=(jax.ShapeDtypeStruct((B, H, S, d_h), bf16),
                   jax.ShapeDtypeStruct((B, H, S, d_h), bf16)),
        grid_spec=pltpu.PrefetchScalarGridSpec(
            num_scalar_prefetch=0,
            grid=(B, n_r, H),
            in_specs=[
                pl.BlockSpec((1, tr, D), lambda b, r, h: (b, r, 0)),    # K
                pl.BlockSpec((1, tr, D), lambda b, r, h: (b, r, 0)),    # V
                pl.BlockSpec((1, D, d_h), lambda b, r, h: (h, 0, 0)),   # WkH
                pl.BlockSpec((1, 1, d_h), lambda b, r, h: (h, 0, 0)),   # bkH
                pl.BlockSpec((1, D, d_h), lambda b, r, h: (h, 0, 0)),   # WvH
                pl.BlockSpec((1, 1, d_h), lambda b, r, h: (h, 0, 0)),   # bvH
            ],
            out_specs=[
                pl.BlockSpec((1, 1, tr, d_h), lambda b, r, h: (b, h, r, 0)),
                pl.BlockSpec((1, 1, tr, d_h), lambda b, r, h: (b, h, r, 0)),
            ],
        ),
        compiler_params=pltpu.CompilerParams(
            dimension_semantics=("parallel", "parallel", "parallel")),
        cost_estimate=pl.CostEstimate(
            flops=int(4 * B * S * D * D),
            transcendentals=0,
            bytes_accessed=int(2 * B * S * D * 4 + 2 * B * S * D * 2
                               + 4 * D * D * 2)),
    )(K, V, WkH, bkH, WvH, bvH)

    # -------- Kernel B: fused Q-proj + flash attention + output proj --------
    kernel = functools.partial(_flash_attn_kernel, scale=scale)
    out = pl.pallas_call(
        kernel,
        out_shape=jax.ShapeDtypeStruct((B, S, D), Q.dtype),
        grid_spec=pltpu.PrefetchScalarGridSpec(
            num_scalar_prefetch=0,
            grid=(B, n_q, H, n_kv),
            in_specs=[
                pl.BlockSpec((1, tq, D), lambda b, q, h, k: (b, q, 0)),        # Q
                pl.BlockSpec((1, D, d_h), lambda b, q, h, k: (h, 0, 0)),       # WqH
                pl.BlockSpec((1, 1, d_h), lambda b, q, h, k: (h, 0, 0)),       # bqH
                pl.BlockSpec((1, 1, tk, d_h), lambda b, q, h, k: (b, h, k, 0)),  # Kp
                pl.BlockSpec((1, 1, tk, d_h), lambda b, q, h, k: (b, h, k, 0)),  # Vp
                pl.BlockSpec((1, tq, tk), lambda b, q, h, k: (b, q, k)),       # mask bias
                pl.BlockSpec((1, d_h, D), lambda b, q, h, k: (h, 0, 0)),       # WoH
                pl.BlockSpec((1, D), lambda b, q, h, k: (0, 0)),               # b_O
            ],
            out_specs=pl.BlockSpec((1, tq, D), lambda b, q, h, k: (b, q, 0)),
            scratch_shapes=[
                pltpu.VMEM((tq, d_h), bf16),   # scaled projected Q (per head)
                pltpu.VMEM((tq, 1), f32),      # running max
                pltpu.VMEM((tq, 1), f32),      # running denominator
                pltpu.VMEM((tq, d_h), f32),    # per-head context accumulator
                pltpu.VMEM((tq, D), f32),      # output-projection accumulator
            ],
        ),
        compiler_params=pltpu.CompilerParams(
            dimension_semantics=("parallel", "parallel", "arbitrary", "arbitrary")),
        cost_estimate=pl.CostEstimate(
            flops=int(4 * B * S * D * D + 4 * B * S * S * D),
            transcendentals=int(B * H * S * S),
            bytes_accessed=int(4 * B * S * D + 2 * 2 * B * S * D
                               + 2 * B * S * S + 4 * B * S * D + 6 * D * D)),
    )(Q, WqH, bqH, Kp, Vp, bias, WoH, bo)
    return out


# ---------------------------------------------------------------------------
# Pure-JAX reference mirroring the PyTorch module (f32 everywhere)
# ---------------------------------------------------------------------------
def reference_mha(Q, K, V, attn_mask, params, *, n_heads):
    B, S, D = Q.shape
    d_h = D // n_heads

    def lin(x, W, b):
        return x @ W.T + b

    q = lin(Q, params["W_Q"], params["b_Q"]).reshape(B, S, n_heads, d_h).transpose(0, 2, 1, 3)
    k = lin(K, params["W_K"], params["b_K"]).reshape(B, S, n_heads, d_h).transpose(0, 2, 1, 3)
    v = lin(V, params["W_V"], params["b_V"]).reshape(B, S, n_heads, d_h).transpose(0, 2, 1, 3)

    scores = jnp.einsum("bhqd,bhkd->bhqk", q, k) / math.sqrt(d_h)
    scores = jnp.where(attn_mask[:, None, :, :] == 0, -1e9, scores)
    attn = jax.nn.softmax(scores, axis=-1)
    ctx = jnp.einsum("bhqk,bhkd->bhqd", attn, v)
    ctx = ctx.transpose(0, 2, 1, 3).reshape(B, S, D)
    return lin(ctx, params["W_O"], params["b_O"])


def init_params(key, d_model):
    """Deterministic init mimicking nn.Linear default (uniform +-1/sqrt(fan_in))."""
    bound = 1.0 / math.sqrt(d_model)
    keys = jax.random.split(key, 8)
    names = ["W_Q", "b_Q", "W_K", "b_K", "W_V", "b_V", "W_O", "b_O"]
    params = {}
    for i, name in enumerate(names):
        shape = (d_model, d_model) if name.startswith("W") else (d_model,)
        params[name] = jax.random.uniform(
            keys[i], shape, dtype=jnp.float32, minval=-bound, maxval=bound)
    return params


if __name__ == "__main__":
    B, S, n_heads, d_model = 2, 8, 4, 32

    key = jax.random.PRNGKey(0)
    kq, kk, kv, kp = jax.random.split(key, 4)
    Q = jax.random.normal(kq, (B, S, d_model), dtype=jnp.float32)
    K = jax.random.normal(kk, (B, S, d_model), dtype=jnp.float32)
    V = jax.random.normal(kv, (B, S, d_model), dtype=jnp.float32)
    # causal mask (1 = attend, 0 = masked), shape (B, S, S)
    attn_mask = jnp.broadcast_to(
        jnp.tril(jnp.ones((S, S), dtype=jnp.float32)), (B, S, S))

    params = init_params(kp, d_model)

    out = multi_head_attention(Q, K, V, attn_mask, params, n_heads=n_heads)
    out = jax.block_until_ready(out)

    ref = reference_mha(Q, K, V, attn_mask, params, n_heads=n_heads)
    assert out.shape == (B, S, d_model)
    max_err = float(jnp.max(jnp.abs(out - ref)))
    # bf16 MXU operands + approx reciprocal -> loosened tolerance vs f32 reference
    assert max_err < 5e-2, f"mismatch vs reference, max abs err = {max_err}"

    print("KERNEL_OK")
</pallas_src>

<mosaic_0001>
module attributes {stable_mosaic.version = 11 : i64} {
  func.func @_kv_proj_kernel(%arg0: i32, %arg1: i32, %arg2: i32, %arg3: memref<1x8x32xf32, #tpu.memory_space<vmem>>, %arg4: memref<1x8x32xf32, #tpu.memory_space<vmem>>, %arg5: memref<1x32x8xbf16, #tpu.memory_space<vmem>>, %arg6: memref<1x1x8xf32, #tpu.memory_space<vmem>>, %arg7: memref<1x32x8xbf16, #tpu.memory_space<vmem>>, %arg8: memref<1x1x8xf32, #tpu.memory_space<vmem>>, %arg9: memref<1x1x8x8xbf16, #tpu.memory_space<vmem>>, %arg10: memref<1x1x8x8xbf16, #tpu.memory_space<vmem>>) attributes {dimension_semantics = [#tpu.dimension_semantics<parallel>, #tpu.dimension_semantics<parallel>, #tpu.dimension_semantics<parallel>], iteration_bounds = array<i64: 2, 1, 4>, scalar_prefetch = 0 : i64, scratch_operands = 0 : i64, tpu.core_type = #tpu.core_type<tc>, window_params = [{transform_indices = @transform_0, window_bounds = array<i64: 1, 8, 32>}, {transform_indices = @transform_1, window_bounds = array<i64: 1, 8, 32>}, {transform_indices = @transform_2, window_bounds = array<i64: 1, 32, 8>}, {transform_indices = @transform_3, window_bounds = array<i64: 1, 1, 8>}, {transform_indices = @transform_4, window_bounds = array<i64: 1, 32, 8>}, {transform_indices = @transform_5, window_bounds = array<i64: 1, 1, 8>}, {transform_indices = @transform_6, window_bounds = array<i64: 1, 1, 8, 8>}, {transform_indices = @transform_7, window_bounds = array<i64: 1, 1, 8, 8>}]} {
    %c0 = arith.constant 0 : index
    %c0_0 = arith.constant 0 : index
    %c0_1 = arith.constant 0 : index
    %0 = vector.load %arg3[%c0, %c0_0, %c0_1] : memref<1x8x32xf32, #tpu.memory_space<vmem>>, vector<1x8x32xf32>
    %1 = vector.shape_cast %0 : vector<1x8x32xf32> to vector<8x32xf32>
    %2 = arith.truncf %1 : vector<8x32xf32> to vector<8x32xbf16>
    %c0_2 = arith.constant 0 : index
    %c0_3 = arith.constant 0 : index
    %c0_4 = arith.constant 0 : index
    %3 = vector.load %arg4[%c0_2, %c0_3, %c0_4] : memref<1x8x32xf32, #tpu.memory_space<vmem>>, vector<1x8x32xf32>
    %4 = vector.shape_cast %3 : vector<1x8x32xf32> to vector<8x32xf32>
    %5 = arith.truncf %4 : vector<8x32xf32> to vector<8x32xbf16>
    %c0_5 = arith.constant 0 : index
    %c0_6 = arith.constant 0 : index
    %c0_7 = arith.constant 0 : index
    %6 = vector.load %arg5[%c0_5, %c0_6, %c0_7] : memref<1x32x8xbf16, #tpu.memory_space<vmem>>, vector<1x32x8xbf16>
    %7 = vector.shape_cast %6 : vector<1x32x8xbf16> to vector<32x8xbf16>
    %cst = arith.constant dense<0.000000e+00> : vector<8x8xf32>
    %8 = tpu.matmul %2, %7, %cst {dimension_numbers = #tpu.dot_dimension_numbers<[1], [0], [0], [1], [0, 0, 1, 1], [], []>} : vector<8x32xbf16>, vector<32x8xbf16>, vector<8x8xf32> -> vector<8x8xf32>
    %c0_8 = arith.constant 0 : index
    %c0_9 = arith.constant 0 : index
    %c0_10 = arith.constant 0 : index
    %9 = vector.load %arg6[%c0_8, %c0_9, %c0_10] : memref<1x1x8xf32, #tpu.memory_space<vmem>>, vector<1x1x8xf32>
    %10 = vector.shape_cast %9 : vector<1x1x8xf32> to vector<1x8xf32>
    %11 = vector.broadcast %10 : vector<1x8xf32> to vector<8x8xf32>
    %12 = arith.addf %8, %11 : vector<8x8xf32>
    %c0_11 = arith.constant 0 : index
    %c0_12 = arith.constant 0 : index
    %c0_13 = arith.constant 0 : index
    %13 = vector.load %arg7[%c0_11, %c0_12, %c0_13] : memref<1x32x8xbf16, #tpu.memory_space<vmem>>, vector<1x32x8xbf16>
    %14 = vector.shape_cast %13 : vector<1x32x8xbf16> to vector<32x8xbf16>
    %cst_14 = arith.constant dense<0.000000e+00> : vector<8x8xf32>
    %15 = tpu.matmul %5, %14, %cst_14 {dimension_numbers = #tpu.dot_dimension_numbers<[1], [0], [0], [1], [0, 0, 1, 1], [], []>} : vector<8x32xbf16>, vector<32x8xbf16>, vector<8x8xf32> -> vector<8x8xf32>
    %c0_15 = arith.constant 0 : index
    %c0_16 = arith.constant 0 : index
    %c0_17 = arith.constant 0 : index
    %16 = vector.load %arg8[%c0_15, %c0_16, %c0_17] : memref<1x1x8xf32, #tpu.memory_space<vmem>>, vector<1x1x8xf32>
    %17 = vector.shape_cast %16 : vector<1x1x8xf32> to vector<1x8xf32>
    %18 = vector.broadcast %17 : vector<1x8xf32> to vector<8x8xf32>
    %19 = arith.addf %15, %18 : vector<8x8xf32>
    %20 = arith.truncf %12 : vector<8x8xf32> to vector<8x8xbf16>
    %c0_18 = arith.constant 0 : index
    %c0_19 = arith.constant 0 : index
    %c0_20 = arith.constant 0 : index
    %c0_21 = arith.constant 0 : index
    %21 = vector.load %arg9[%c0_18, %c0_19, %c0_20, %c0_21] : memref<1x1x8x8xbf16, #tpu.memory_space<vmem>>, vector<1x1x8x8xbf16>
    %22 = vector.shape_cast %21 : vector<1x1x8x8xbf16> to vector<8x8xbf16>
    %23 = vector.shape_cast %20 : vector<8x8xbf16> to vector<1x1x8x8xbf16>
    tpu.vector_store %arg9[%c0_18, %c0_19, %c0_20, %c0_21], %23 {strides = array<i32>} : memref<1x1x8x8xbf16, #tpu.memory_space<vmem>>, vector<1x1x8x8xbf16>,
    %24 = arith.truncf %19 : vector<8x8xf32> to vector<8x8xbf16>
    %c0_22 = arith.constant 0 : index
    %c0_23 = arith.constant 0 : index
    %c0_24 = arith.constant 0 : index
    %c0_25 = arith.constant 0 : index
    %25 = vector.load %arg10[%c0_22, %c0_23, %c0_24, %c0_25] : memref<1x1x8x8xbf16, #tpu.memory_space<vmem>>, vector<1x1x8x8xbf16>
    %26 = vector.shape_cast %25 : vector<1x1x8x8xbf16> to vector<8x8xbf16>
    %27 = vector.shape_cast %24 : vector<8x8xbf16> to vector<1x1x8x8xbf16>
    tpu.vector_store %arg10[%c0_22, %c0_23, %c0_24, %c0_25], %27 {strides = array<i32>} : memref<1x1x8x8xbf16, #tpu.memory_space<vmem>>, vector<1x1x8x8xbf16>,
    return
  }
  func.func @transform_0(%arg0: i32, %arg1: i32, %arg2: i32) -> (i32, i32, i32) {
    %c0_i32 = arith.constant 0 : i32
    %c0_i32_0 = arith.constant 0 : i32
    return %arg0, %arg1, %c0_i32 : i32, i32, i32
  }
  func.func @transform_1(%arg0: i32, %arg1: i32, %arg2: i32) -> (i32, i32, i32) {
    %c0_i32 = arith.constant 0 : i32
    %c0_i32_0 = arith.constant 0 : i32
    return %arg0, %arg1, %c0_i32 : i32, i32, i32
  }
  func.func @transform_2(%arg0: i32, %arg1: i32, %arg2: i32) -> (i32, i32, i32) {
    %c0_i32 = arith.constant 0 : i32
    %c0_i32_0 = arith.constant 0 : i32
    %c0_i32_1 = arith.constant 0 : i32
    return %arg2, %c0_i32, %c0_i32_0 : i32, i32, i32
  }
  func.func @transform_3(%arg0: i32, %arg1: i32, %arg2: i32) -> (i32, i32, i32) {
    %c0_i32 = arith.constant 0 : i32
    %c0_i32_0 = arith.constant 0 : i32
    %c0_i32_1 = arith.constant 0 : i32
    return %arg2, %c0_i32, %c0_i32_0 : i32, i32, i32
  }
  func.func @transform_4(%arg0: i32, %arg1: i32, %arg2: i32) -> (i32, i32, i32) {
    %c0_i32 = arith.constant 0 : i32
    %c0_i32_0 = arith.constant 0 : i32
    %c0_i32_1 = arith.constant 0 : i32
    return %arg2, %c0_i32, %c0_i32_0 : i32, i32, i32
  }
  func.func @transform_5(%arg0: i32, %arg1: i32, %arg2: i32) -> (i32, i32, i32) {
    %c0_i32 = arith.constant 0 : i32
    %c0_i32_0 = arith.constant 0 : i32
    %c0_i32_1 = arith.constant 0 : i32
    return %arg2, %c0_i32, %c0_i32_0 : i32, i32, i32
  }
  func.func @transform_6(%arg0: i32, %arg1: i32, %arg2: i32) -> (i32, i32, i32, i32) {
    %c0_i32 = arith.constant 0 : i32
    %c0_i32_0 = arith.constant 0 : i32
    return %arg0, %arg2, %arg1, %c0_i32 : i32, i32, i32, i32
  }
  func.func @transform_7(%arg0: i32, %arg1: i32, %arg2: i32) -> (i32, i32, i32, i32) {
    %c0_i32 = arith.constant 0 : i32
    %c0_i32_0 = arith.constant 0 : i32
    return %arg0, %arg2, %arg1, %c0_i32 : i32, i32, i32, i32
  }
}

</mosaic_0001>

<llo_original>
// kernel: tpu_custom_call.1
$region0: #{tpu_custom_call.1}
  #allocation0 [shape = 'u32[]', space=smem, size = 0x4, offset = 0x4, fixed_abs, tag = 'smem constant byte address 0x4 - core index']
  #allocation1 [shape = 'u32[144,128]{1,0:T(1,128)}', space=vmem, size = 0x12000, scoped, tag = 'internal scratch']
  %s0 = inlined_call_operand.vmem [shape: f32[2,8,32], index: 0, kind: input, shape index: {}]
  %s1 = inlined_call_operand.vmem [shape: f32[2,8,32], index: 1, kind: input, shape index: {}]
  %s2 = inlined_call_operand.vmem [shape: bf16[4,32,8], index: 2, kind: input, shape index: {}]
  %s3 = inlined_call_operand.vmem [shape: f32[4,1,8], index: 3, kind: input, shape index: {}]
  %s4 = inlined_call_operand.vmem [shape: bf16[4,32,8], index: 4, kind: input, shape index: {}]
  %s5 = inlined_call_operand.vmem [shape: f32[4,1,8], index: 5, kind: input, shape index: {}]
  %s6 = inlined_call_operand.hbm [shape: bf16[2,4,8,8], index: 6, kind: output, shape index: {0}]
  %s7 = inlined_call_operand.hbm [shape: bf16[2,4,8,8], index: 7, kind: output, shape index: {1}]
  %8 = xla_tuple %s6, %s7
  %s9 = sld [smem:[#allocation0]]
  $region65: #{tpu_custom_call.1} parent=0
    _
  %s11 = ssub.s32 1, %s9
  %s12 = scalar_select 0, %s11, %s9
  $region1: #{tpu_custom_call.1} parent=0
    #allocation2 [shape = 'u8[4096]{0}', space=vmem, size = 0x1000, scoped, tag = 'output window, operand 0']
    #allocation3 [shape = 's32[2]{0}', space=sflag, size = 0x8, scoped, tag = 'scoped memory for tpu_custom_call.1']
    #allocation4 [shape = 'u8[4096]{0}', space=vmem, size = 0x1000, scoped, tag = 'output window, operand 1']
    #allocation5 [shape = 's32[2]{0}', space=sflag, size = 0x8, scoped, tag = 'scoped memory for tpu_custom_call.1']
    %13 = vsyncpa [#allocation3], 0
    %s14 = scalar_lea.sflag [#allocation3], 1
    %15 = vsyncpa %s14, 0
    %16 = vsyncpa [#allocation5], 0
    %s17 = scalar_lea.sflag [#allocation5], 1
    %18 = vsyncpa %s17, 0
    loop: start=0, step=1, limit=10
    $region2: #{tpu_custom_call.1} parent=1 // loop_pre_header
      _
    $region3: #{tpu_custom_call.1} parent=1 // loop_header
      %s20 = sphi 0, %s24
      %p21 = scmp.ge.s32.totalorder %s20, 10
      %s27 = sphi 0, %s46
      %s28 = sphi 0, %s42
      %s29 = sphi 0, %s38
      %s30 = sphi 0, %s27
      %s31 = sphi 0, %s28
      %s32 = sphi 0, %s29
      %s33 = sphi 0, %s30
      %s34 = sphi 0, %s31
      %s35 = sphi 0, %s32
      %s51 = sphi 0, %s53
      %s54 = sphi 0, %s51
      %s55 = sphi 0, %s54
      %s71 = sphi 0, %s55
      %s79 = sphi 0, %s81
      %s82 = sphi 0, %s79
      %s83 = sphi 0, %s82
      %s99 = sphi 0, %s83
      %s105 = sphi 0, %s107
      %s108 = sphi 0, %s105
      %s109 = sphi 0, %s108
      %s125 = sphi 0, %s109
      %s131 = sphi 0, %s133
      %s134 = sphi 0, %s131
      %s135 = sphi 0, %s134
      %s151 = sphi 0, %s135
      %s157 = sphi 0, %s159
      %s160 = sphi 0, %s157
      %s161 = sphi 0, %s160
      %s177 = sphi 0, %s161
      %s183 = sphi 0, %s185
      %s186 = sphi 0, %s183
      %s187 = sphi 0, %s186
      %s203 = sphi 0, %s187
      %s213 = sphi 0, %s215
      %s216 = sphi 0, %s213
      %s217 = sphi 0, %s216
      %s233 = sphi 0, %s217
      %s243 = sphi 0, %s245
      %s246 = sphi 0, %s243
      %s247 = sphi 0, %s246
      %s263 = sphi 0, %s247
    $region4: #{tpu_custom_call.1} parent=1 // loop_header_branch
      %23 = sbr.rel (%p21) target = $region8
    $region5: #{tpu_custom_call.1} parent=1 // loop_body
      %s25 = ssub.s32 %s20, 1
      %s26 = ssub.s32 %s20, 2
      %s36 = sadd.s32 1, %s29
      %p37 = scmp.ge.s32.totalorder %s36, 4
      %s38 = scalar_select %p37, 0, %s36
      %s39 = sadd.s32 1, %s28
      %s40 = scalar_select %p37, %s39, %s28
      %p41 = scmp.ge.s32.totalorder %s40, 1
      %s42 = scalar_select %p41, 0, %s40
      %s43 = sadd.s32 1, %s27
      %s44 = scalar_select %p41, %s43, %s27
      %p45 = scmp.ge.s32.totalorder %s44, 2
      %s46 = scalar_select %p45, 0, %s44
      %s47 = ssub.s32 %s27, %s46
      %s48 = ssub.s32 %s28, %s42
      %s49 = sor.u32 %s47, %s48
      %p50 = scmp.eq.s32.totalorder %s49, 0
      %s52 = sadd.s32 %s51, 1
      %s53 = scalar_select %p50, %s51, %s52
      %p56 = pneg %p50
      %p57 = scmp.eq.s32.totalorder %s20, 7
      %p58 = por %p56, %p57
      %p59 = scmp.ne.s32.totalorder %s51, %s54
      %p60 = scmp.eq.s32.totalorder %s20, 0
      %p61 = por %p59, %p60
      %p62 = scmp.ne.s32.totalorder %s51, %s54
      %p63 = scmp.eq.s32.totalorder %s25, 7
      %p64 = por %p62, %p63
      %p65 = scmp.ne.s32.totalorder %s54, %s55
      %p66 = scmp.eq.s32.totalorder %s25, 0
      %p67 = por %p65, %p66
      %p68 = scmp.ne.s32.totalorder %s54, %s55
      %p69 = scmp.eq.s32.totalorder %s26, 7
      %p70 = por %p68, %p69
      %p72 = scmp.ne.s32.totalorder %s55, %s71
      %p73 = scmp.eq.s32.totalorder %s26, 0
      %p74 = por %p72, %p73
      %s75 = ssub.s32 %s27, %s46
      %s76 = ssub.s32 %s28, %s42
      %s77 = sor.u32 %s75, %s76
      %p78 = scmp.eq.s32.totalorder %s77, 0
      %s80 = sadd.s32 %s79, 1
      %s81 = scalar_select %p78, %s79, %s80
      %p84 = pneg %p78
      %p85 = scmp.eq.s32.totalorder %s20, 7
      %p86 = por %p84, %p85
      %p87 = scmp.ne.s32.totalorder %s79, %s82
      %p88 = scmp.eq.s32.totalorder %s20, 0
      %p89 = por %p87, %p88
      %p90 = scmp.ne.s32.totalorder %s79, %s82
      %p91 = scmp.eq.s32.totalorder %s25, 7
      %p92 = por %p90, %p91
      %p93 = scmp.ne.s32.totalorder %s82, %s83
      %p94 = scmp.eq.s32.totalorder %s25, 0
      %p95 = por %p93, %p94
      %p96 = scmp.ne.s32.totalorder %s82, %s83
      %p97 = scmp.eq.s32.totalorder %s26, 7
      %p98 = por %p96, %p97
      %p100 = scmp.ne.s32.totalorder %s83, %s99
      %p101 = scmp.eq.s32.totalorder %s26, 0
      %p102 = por %p100, %p101
      %s103 = ssub.s32 %s29, %s38
      %p104 = scmp.eq.s32.totalorder %s103, 0
      %s106 = sadd.s32 %s105, 1
      %s107 = scalar_select %p104, %s105, %s106
      %p110 = pneg %p104
      %p111 = scmp.eq.s32.totalorder %s20, 7
      %p112 = por %p110, %p111
      %p113 = scmp.ne.s32.totalorder %s105, %s108
      %p114 = scmp.eq.s32.totalorder %s20, 0
      %p115 = por %p113, %p114
      %p116 = scmp.ne.s32.totalorder %s105, %s108
      %p117 = scmp.eq.s32.totalorder %s25, 7
      %p118 = por %p116, %p117
      %p119 = scmp.ne.s32.totalorder %s108, %s109
      %p120 = scmp.eq.s32.totalorder %s25, 0
      %p121 = por %p119, %p120
      %p122 = scmp.ne.s32.totalorder %s108, %s109
      %p123 = scmp.eq.s32.totalorder %s26, 7
      %p124 = por %p122, %p123
      %p126 = scmp.ne.s32.totalorder %s109, %s125
      %p127 = scmp.eq.s32.totalorder %s26, 0
      %p128 = por %p126, %p127
      %s129 = ssub.s32 %s29, %s38
      %p130 = scmp.eq.s32.totalorder %s129, 0
      %s132 = sadd.s32 %s131, 1
      %s133 = scalar_select %p130, %s131, %s132
      %p136 = pneg %p130
      %p137 = scmp.eq.s32.totalorder %s20, 7
      %p138 = por %p136, %p137
      %p139 = scmp.ne.s32.totalorder %s131, %s134
      %p140 = scmp.eq.s32.totalorder %s20, 0
      %p141 = por %p139, %p140
      %p142 = scmp.ne.s32.totalorder %s131, %s134
      %p143 = scmp.eq.s32.totalorder %s25, 7
      %p144 = por %p142, %p143
      %p145 = scmp.ne.s32.totalorder %s134, %s135
      %p146 = scmp.eq.s32.totalorder %s25, 0
      %p147 = por %p145, %p146
      %p148 = scmp.ne.s32.totalorder %s134, %s135
      %p149 = scmp.eq.s32.totalorder %s26, 7
      %p150 = por %p148, %p149
      %p152 = scmp.ne.s32.totalorder %s135, %s151
      %p153 = scmp.eq.s32.totalorder %s26, 0
      %p154 = por %p152, %p153
      %s155 = ssub.s32 %s29, %s38
      %p156 = scmp.eq.s32.totalorder %s155, 0
      %s158 = sadd.s32 %s157, 1
      %s159 = scalar_select %p156, %s157, %s158
      %p162 = pneg %p156
      %p163 = scmp.eq.s32.totalorder %s20, 7
      %p164 = por %p162, %p163
      %p165 = scmp.ne.s32.totalorder %s157, %s160
      %p166 = scmp.eq.s32.totalorder %s20, 0
      %p167 = por %p165, %p166
      %p168 = scmp.ne.s32.totalorder %s157, %s160
      %p169 = scmp.eq.s32.totalorder %s25, 7
      %p170 = por %p168, %p169
      %p171 = scmp.ne.s32.totalorder %s160, %s161
      %p172 = scmp.eq.s32.totalorder %s25, 0
      %p173 = por %p171, %p172
      %p174 = scmp.ne.s32.totalorder %s160, %s161
      %p175 = scmp.eq.s32.totalorder %s26, 7
      %p176 = por %p174, %p175
      %p178 = scmp.ne.s32.totalorder %s161, %s177
      %p179 = scmp.eq.s32.totalorder %s26, 0
      %p180 = por %p178, %p179
      %s181 = ssub.s32 %s29, %s38
      %p182 = scmp.eq.s32.totalorder %s181, 0
      %s184 = sadd.s32 %s183, 1
      %s185 = scalar_select %p182, %s183, %s184
      %p188 = pneg %p182
      %p189 = scmp.eq.s32.totalorder %s20, 7
      %p190 = por %p188, %p189
      %p191 = scmp.ne.s32.totalorder %s183, %s186
      %p192 = scmp.eq.s32.totalorder %s20, 0
      %p193 = por %p191, %p192
      %p194 = scmp.ne.s32.totalorder %s183, %s186
      %p195 = scmp.eq.s32.totalorder %s25, 7
      %p196 = por %p194, %p195
      %p197 = scmp.ne.s32.totalorder %s186, %s187
      %p198 = scmp.eq.s32.totalorder %s25, 0
      %p199 = por %p197, %p198
      %p200 = scmp.ne.s32.totalorder %s186, %s187
      %p201 = scmp.eq.s32.totalorder %s26, 7
      %p202 = por %p200, %p201
      %p204 = scmp.ne.s32.totalorder %s187, %s203
      %p205 = scmp.eq.s32.totalorder %s26, 0
      %p206 = por %p204, %p205
      %s207 = ssub.s32 %s27, %s46
      %s208 = ssub.s32 %s29, %s38
      %s209 = sor.u32 %s207, %s208
      %s210 = ssub.s32 %s28, %s42
      %s211 = sor.u32 %s209, %s210
      %p212 = scmp.eq.s32.totalorder %s211, 0
      %s214 = sadd.s32 %s213, 1
      %s215 = scalar_select %p212, %s213, %s214
      %p218 = pneg %p212
      %p219 = scmp.eq.s32.totalorder %s20, 7
      %p220 = por %p218, %p219
      %p221 = scmp.ne.s32.totalorder %s213, %s216
      %p222 = scmp.eq.s32.totalorder %s20, 0
      %p223 = por %p221, %p222
      %p224 = scmp.ne.s32.totalorder %s213, %s216
      %p225 = scmp.eq.s32.totalorder %s25, 7
      %p226 = por %p224, %p225
      %p227 = scmp.ne.s32.totalorder %s216, %s217
      %p228 = scmp.eq.s32.totalorder %s25, 0
      %p229 = por %p227, %p228
      %p230 = scmp.ne.s32.totalorder %s216, %s217
      %p231 = scmp.eq.s32.totalorder %s26, 7
      %p232 = por %p230, %p231
      %p234 = scmp.ne.s32.totalorder %s217, %s233
      %p235 = scmp.eq.s32.totalorder %s26, 0
      %p236 = por %p234, %p235
      %s237 = ssub.s32 %s27, %s46
      %s238 = ssub.s32 %s29, %s38
      %s239 = sor.u32 %s237, %s238
      %s240 = ssub.s32 %s28, %s42
      %s241 = sor.u32 %s239, %s240
      %p242 = scmp.eq.s32.totalorder %s241, 0
      %s244 = sadd.s32 %s243, 1
      %s245 = scalar_select %p242, %s243, %s244
      %p248 = pneg %p242
      %p249 = scmp.eq.s32.totalorder %s20, 7
      %p250 = por %p248, %p249
      %p251 = scmp.ne.s32.totalorder %s243, %s246
      %p252 = scmp.eq.s32.totalorder %s20, 0
      %p253 = por %p251, %p252
      %p254 = scmp.ne.s32.totalorder %s243, %s246
      %p255 = scmp.eq.s32.totalorder %s25, 7
      %p256 = por %p254, %p255
      %p257 = scmp.ne.s32.totalorder %s246, %s247
      %p258 = scmp.eq.s32.totalorder %s25, 0
      %p259 = por %p257, %p258
      %p260 = scmp.ne.s32.totalorder %s246, %s247
      %p261 = scmp.eq.s32.totalorder %s26, 7
      %p262 = por %p260, %p261
      %p264 = scmp.ne.s32.totalorder %s247, %s263
      %p265 = scmp.eq.s32.totalorder %s26, 0
      %p266 = por %p264, %p265
      %p267 = scmp.le.s32.totalorder 1, %s20
      %p268 = scmp.lt.s32.totalorder %s20, 9
      %p269 = pnand %p267, %p268
      %p270 = pneg %p269
      // Predicated region
      $region9: #{tpu_custom_call.1} parent=5 // pred_check
        _
      $region10: #{tpu_custom_call.1} parent=5 // pred_check_branch
        %272 = sbr.rel (%p269) target = $region12
      $region11: #{tpu_custom_call.1} parent=5 // pred_region
        %s273 = ssub.s32 %s20, 1
      $region12: #{tpu_custom_call.1} parent=5 // pred_fallthru
        _
      %p274 = scmp.lt.s32.totalorder %s20, 8
      // Predicated region
      $region13: #{tpu_custom_call.1} parent=5 // pred_check
        %p275 = pneg %p274
      $region14: #{tpu_custom_call.1} parent=5 // pred_check_branch
        %277 = sbr.rel (%p275) target = $region16
      $region15: #{tpu_custom_call.1} parent=5 // pred_region
        // Predicated region
        $region17: #{tpu_custom_call.1} parent=15 // pred_check
          %p278 = pneg %p61
        $region18: #{tpu_custom_call.1} parent=15 // pred_check_branch
          %280 = sbr.rel (%p278) target = $region20
        $region19: #{tpu_custom_call.1} parent=15 // pred_region
          %p281 = scmp.lt.s32.totalorder %s27, 1
          %s282 = scalar_select %p281, %s27, 1
          %p283 = scmp.lt.s32.totalorder %s28, 0
          %s284 = scalar_select %p283, %s28, 0
          %s285 = sadd.s32 %s284, %s282
          %s286 = smul.addr %s285, 8
          %s287 = scalar_lea.vmem %s0, %s286
        $region20: #{tpu_custom_call.1} parent=15 // pred_fallthru
          _
        // Predicated region
        $region21: #{tpu_custom_call.1} parent=15 // pred_check
          %p288 = pneg %p89
        $region22: #{tpu_custom_call.1} parent=15 // pred_check_branch
          %290 = sbr.rel (%p288) target = $region24
        $region23: #{tpu_custom_call.1} parent=15 // pred_region
          %p291 = scmp.lt.s32.totalorder %s27, 1
          %s292 = scalar_select %p291, %s27, 1
          %p293 = scmp.lt.s32.totalorder %s28, 0
          %s294 = scalar_select %p293, %s28, 0
          %s295 = sadd.s32 %s294, %s292
          %s296 = smul.addr %s295, 8
          %s297 = scalar_lea.vmem %s1, %s296
        $region24: #{tpu_custom_call.1} parent=15 // pred_fallthru
          _
        // Predicated region
        $region25: #{tpu_custom_call.1} parent=15 // pred_check
          %p298 = pneg %p115
        $region26: #{tpu_custom_call.1} parent=15 // pred_check_branch
          %300 = sbr.rel (%p298) target = $region28
        $region27: #{tpu_custom_call.1} parent=15 // pred_region
          %p301 = scmp.lt.s32.totalorder %s29, 3
          %s302 = scalar_select %p301, %s29, 3
          %s303 = smul.addr %s302, 4
          %s304 = smul.addr %s303, 4
          %s305 = scalar_lea.vmem %s2, %s304
        $region28: #{tpu_custom_call.1} parent=15 // pred_fallthru
          _
        // Predicated region
        $region29: #{tpu_custom_call.1} parent=15 // pred_check
          %p306 = pneg %p141
        $region30: #{tpu_custom_call.1} parent=15 // pred_check_branch
          %308 = sbr.rel (%p306) target = $region32
        $region31: #{tpu_custom_call.1} parent=15 // pred_region
          %p309 = scmp.lt.s32.totalorder %s29, 3
          %s310 = scalar_select %p309, %s29, 3
          %s311 = scalar_lea.vmem %s3, %s310
        $region32: #{tpu_custom_call.1} parent=15 // pred_fallthru
          _
        // Predicated region
        $region33: #{tpu_custom_call.1} parent=15 // pred_check
          %p312 = pneg %p167
        $region34: #{tpu_custom_call.1} parent=15 // pred_check_branch
          %314 = sbr.rel (%p312) target = $region36
        $region35: #{tpu_custom_call.1} parent=15 // pred_region
          %p315 = scmp.lt.s32.totalorder %s29, 3
          %s316 = scalar_select %p315, %s29, 3
          %s317 = smul.addr %s316, 4
          %s318 = smul.addr %s317, 4
          %s319 = scalar_lea.vmem %s4, %s318
        $region36: #{tpu_custom_call.1} parent=15 // pred_fallthru
          _
        // Predicated region
        $region37: #{tpu_custom_call.1} parent=15 // pred_check
          %p320 = pneg %p193
        $region38: #{tpu_custom_call.1} parent=15 // pred_check_branch
          %322 = sbr.rel (%p320) target = $region40
        $region39: #{tpu_custom_call.1} parent=15 // pred_region
          %p323 = scmp.lt.s32.totalorder %s29, 3
          %s324 = scalar_select %p323, %s29, 3
          %s325 = scalar_lea.vmem %s5, %s324
        $region40: #{tpu_custom_call.1} parent=15 // pred_fallthru
          _
      $region16: #{tpu_custom_call.1} parent=5 // pred_fallthru
        _
      %p326 = scmp.le.s32.totalorder 1, %s20
      %p327 = scmp.lt.s32.totalorder %s20, 9
      %p328 = pnand %p326, %p327
      %p329 = pneg %p328
      // Predicated region
      $region41: #{tpu_custom_call.1} parent=5 // pred_check
        _
      $region42: #{tpu_custom_call.1} parent=5 // pred_check_branch
        %331 = sbr.rel (%p328) target = $region44
      $region43: #{tpu_custom_call.1} parent=5 // pred_region
        %s332 = ssub.s32 %s20, 1
        %p333 = scmp.lt.s32.totalorder %s30, 1
        %s334 = scalar_select %p333, %s30, 1
        %p335 = scmp.lt.s32.totalorder %s31, 0
        %s336 = scalar_select %p335, %s31, 0
        %s337 = sadd.s32 %s336, %s334
        %s338 = smul.addr %s337, 8
        %s339 = scalar_lea.vmem %s0, %s338
        %p340 = pneg %p67
        %p341 = pneg %p64
        %p342 = scmp.lt.s32.totalorder %s30, 1
        %s343 = scalar_select %p342, %s30, 1
        %p344 = scmp.lt.s32.totalorder %s31, 0
        %s345 = scalar_select %p344, %s31, 0
        %s346 = sadd.s32 %s345, %s343
        %s347 = smul.addr %s346, 8
        %s348 = scalar_lea.vmem %s1, %s347
        %p349 = pneg %p95
        %p350 = pneg %p92
        %p351 = scmp.lt.s32.totalorder %s32, 3
        %s352 = scalar_select %p351, %s32, 3
        %s353 = smul.addr %s352, 4
        %s354 = smul.addr %s353, 4
        %s355 = scalar_lea.vmem %s2, %s354
        %p356 = pneg %p121
        %p357 = pneg %p118
        %p358 = scmp.lt.s32.totalorder %s32, 3
        %s359 = scalar_select %p358, %s32, 3
        %s360 = scalar_lea.vmem %s3, %s359
        %p361 = pneg %p147
        %p362 = pneg %p144
        %p363 = scmp.lt.s32.totalorder %s32, 3
        %s364 = scalar_select %p363, %s32, 3
        %s365 = smul.addr %s364, 4
        %s366 = smul.addr %s365, 4
        %s367 = scalar_lea.vmem %s4, %s366
        %p368 = pneg %p173
        %p369 = pneg %p170
        %p370 = scmp.lt.s32.totalorder %s32, 3
        %s371 = scalar_select %p370, %s32, 3
        %s372 = scalar_lea.vmem %s5, %s371
        %p373 = pneg %p199
        %p374 = pneg %p196
        %p375 = pneg %p229
        %p376 = pneg %p226
        %s377 = sand.u32 %s216, 1
        %s378 = scalar_lea.sflag [#allocation3], %s377
        %s379 = sand.u32 %s216, 1
        %s380 = smul.addr %s379, 4
        %s381 = scalar_lea.vmem [#allocation2], %s380
        %p382 = pneg %p259
        %p383 = pneg %p256
        %s384 = sand.u32 %s246, 1
        %s385 = scalar_lea.sflag [#allocation5], %s384
        %s386 = sand.u32 %s246, 1
        %s387 = smul.addr %s386, 4
        %s388 = scalar_lea.vmem [#allocation4], %s387
        %p389 = scmp.lt.s32.totalorder %s30, 1
        %s390 = scalar_select %p389, %s30, 1
        %p391 = scmp.lt.s32.totalorder %s31, 0
        %s392 = scalar_select %p391, %s31, 0
        %s393 = sadd.s32 %s392, %s390
        %s394 = smul.addr %s393, 8
        %s395 = scalar_lea.vmem %s0, %s394
        %p396 = scmp.lt.s32.totalorder %s30, 1
        %s397 = scalar_select %p396, %s30, 1
        %p398 = scmp.lt.s32.totalorder %s31, 0
        %s399 = scalar_select %p398, %s31, 0
        %s400 = sadd.s32 %s399, %s397
        %s401 = smul.addr %s400, 8
        %s402 = scalar_lea.vmem %s1, %s401
        %p403 = scmp.lt.s32.totalorder %s32, 3
        %s404 = scalar_select %p403, %s32, 3
        %s405 = smul.addr %s404, 4
        %s406 = smul.addr %s405, 4
        %s407 = scalar_lea.vmem %s2, %s406
        %p408 = scmp.lt.s32.totalorder %s32, 3
        %s409 = scalar_select %p408, %s32, 3
        %s410 = scalar_lea.vmem %s3, %s409
        %p411 = scmp.lt.s32.totalorder %s32, 3
        %s412 = scalar_select %p411, %s32, 3
        %s413 = smul.addr %s412, 4
        %s414 = smul.addr %s413, 4
        %s415 = scalar_lea.vmem %s4, %s414
        %p416 = scmp.lt.s32.totalorder %s32, 3
        %s417 = scalar_select %p416, %s32, 3
        %s418 = scalar_lea.vmem %s5, %s417
        %v420 = vld [vmem:[%s395] sm:$0xff]
        %v421 = vpack.c.bf16 %v420, %v420
        %v422 = vld [vmem:[%s402] sm:$0xff]
        %v423 = vpack.c.bf16 %v422, %v422
        %v424 = vld [vmem:[%s407] sm:$0xf]
        %v425 = vld [vmem:[%s407 + $0x4] sm:$0xf]
        %v426 = vld [vmem:[%s407 + $0x8] sm:$0xf]
        %v427 = vld [vmem:[%s407 + $0xc] sm:$0xf]
        %v428 = vld [vmem:[%s410] sm:$0x1]
        %v430 = vlaneseq
        %v431 = vshrl.u32 %v430, 7
        %v432 = vsub.s32 0, %v431
        %v433 = vrot.slane %v428, %v432
        %v439 = vunpack.c.l.b16 %v424
        %v440 = vunpack.c.l.b16 %v425
        %v441 = vunpack.c.l.b16 %v426
        %v442 = vunpack.c.l.b16 %v427
        %v443 = vpack.c.b16 %v440, %v439
        %v444 = vpack.c.b16 %v442, %v441
        %vm447 = vcmask 261120
        %v449 = vsel %vm447, %v421, 0
        %451 = vmatprep.subr.bf16.mxu0 0
        %452 = vmatpush1.bf16.msra.mxu0 %v443
        %453 = vmatprep.subr.bf16.mxu0 0
        %454 = vmatpush1.bf16.msra.mxu0 %v444
        %455 = vmatprep.subr.bf16.mxu0 0
        %456 = vmatpush1.bf16.msra.mxu0 0
        %457 = vmatprep.subr.bf16.mxu0 0
        %458 = vmatpush1.bf16.msra.mxu0 0
        %459 = vmatprep.subr.bf16.mxu0 0
        %460 = vmatpush1.bf16.msra.mxu0 0
        %461 = vmatprep.subr.bf16.mxu0 0
        %462 = vmatpush1.bf16.msra.mxu0 0
        %463 = vmatprep.subr.bf16.mxu0 0
        %464 = vmatpush1.bf16.msra.mxu0 0
        %465 = vmatprep.subr.bf16.mxu0 0
        %466 = vmatpush1.bf16.msra.mxu0 0
        %467 = vmatprep.subr.bf16.mxu0 0
        %468 = vmatpush1.bf16.msra.mxu0 0
        %469 = vmatprep.subr.bf16.mxu0 0
        %470 = vmatpush1.bf16.msra.mxu0 0
        %471 = vmatprep.subr.bf16.mxu0 0
        %472 = vmatpush1.bf16.msra.mxu0 0
        %473 = vmatprep.subr.bf16.mxu0 0
        %474 = vmatpush1.bf16.msra.mxu0 0
        %475 = vmatprep.subr.bf16.mxu0 0
        %476 = vmatpush1.bf16.msra.mxu0 0
        %477 = vmatprep.subr.bf16.mxu0 0
        %478 = vmatpush1.bf16.msra.mxu0 0
        %479 = vmatprep.subr.bf16.mxu0 0
        %480 = vmatpush1.bf16.msra.mxu0 0
        %481 = vmatprep.subr.bf16.mxu0 0
        %482 = vmatpush1.bf16.msra.mxu0 0
        %483 = vmatprep.mubr.bf16.mxu0 0
        %484 = vmatmul.mubr.bf16.gmra.mrb[0].mxu0 %v449
        %v485 = vpop.f32.mrb[0].mxu0
        %v486 = vadd.f32 %v433, %v485
        %v487 = vpop.f32.mrb[0].mxu0
        %v488 = vpop.f32.mrb[0].mxu0
        %v489 = vpop.f32.mrb[0].mxu0
        %490 = vdwg.mxu0
        %v491 = vld [vmem:[%s415] sm:$0xf]
        %v492 = vld [vmem:[%s415 + $0x4] sm:$0xf]
        %v493 = vld [vmem:[%s415 + $0x8] sm:$0xf]
        %v494 = vld [vmem:[%s415 + $0xc] sm:$0xf]
        %v495 = vld [vmem:[%s418] sm:$0x1]
        %v497 = vlaneseq
        %v498 = vshrl.u32 %v497, 7
        %v499 = vsub.s32 0, %v498
        %v500 = vrot.slane %v495, %v499
        %v506 = vunpack.c.l.b16 %v491
        %v507 = vunpack.c.l.b16 %v492
        %v508 = vunpack.c.l.b16 %v493
        %v509 = vunpack.c.l.b16 %v494
        %v510 = vpack.c.b16 %v507, %v506
        %v511 = vpack.c.b16 %v509, %v508
        %v515 = vsel %vm447, %v423, 0
        %517 = vmatprep.subr.bf16.mxu0 0
        %518 = vmatpush1.bf16.msra.mxu0 %v510
        %519 = vmatprep.subr.bf16.mxu0 0
        %520 = vmatpush1.bf16.msra.mxu0 %v511
        %521 = vmatprep.subr.bf16.mxu0 0
        %522 = vmatpush1.bf16.msra.mxu0 0
        %523 = vmatprep.subr.bf16.mxu0 0
        %524 = vmatpush1.bf16.msra.mxu0 0
        %525 = vmatprep.subr.bf16.mxu0 0
        %526 = vmatpush1.bf16.msra.mxu0 0
        %527 = vmatprep.subr.bf16.mxu0 0
        %528 = vmatpush1.bf16.msra.mxu0 0
        %529 = vmatprep.subr.bf16.mxu0 0
        %530 = vmatpush1.bf16.msra.mxu0 0
        %531 = vmatprep.subr.bf16.mxu0 0
        %532 = vmatpush1.bf16.msra.mxu0 0
        %533 = vmatprep.subr.bf16.mxu0 0
        %534 = vmatpush1.bf16.msra.mxu0 0
        %535 = vmatprep.subr.bf16.mxu0 0
        %536 = vmatpush1.bf16.msra.mxu0 0
        %537 = vmatprep.subr.bf16.mxu0 0
        %538 = vmatpush1.bf16.msra.mxu0 0
        %539 = vmatprep.subr.bf16.mxu0 0
        %540 = vmatpush1.bf16.msra.mxu0 0
        %541 = vmatprep.subr.bf16.mxu0 0
        %542 = vmatpush1.bf16.msra.mxu0 0
        %543 = vmatprep.subr.bf16.mxu0 0
        %544 = vmatpush1.bf16.msra.mxu0 0
        %545 = vmatprep.subr.bf16.mxu0 0
        %546 = vmatpush1.bf16.msra.mxu0 0
        %547 = vmatprep.subr.bf16.mxu0 0
        %548 = vmatpush1.bf16.msra.mxu0 0
        %549 = vmatprep.mubr.bf16.mxu0 0
        %550 = vmatmul.mubr.bf16.gmra.mrb[0].mxu0 %v515
        %v551 = vpop.f32.mrb[0].mxu0
        %v552 = vadd.f32 %v500, %v551
        %v553 = vpop.f32.mrb[0].mxu0
        %v554 = vpop.f32.mrb[0].mxu0
        %v555 = vpop.f32.mrb[0].mxu0
        %556 = vdwg.mxu0
        %v557 = vpack.c.bf16 %v486, %v486
        %vm558 = vcmask 60416
        %559 = vst.msk [vmem:[%s381] sm:$0xf] %vm558, %v557
        %v560 = vpack.c.bf16 %v552, %v552
        %561 = vst.msk [vmem:[%s388] sm:$0xf] %vm558, %v560
        %s562 = sand.u32 %s216, 1
        %s563 = scalar_lea.sflag [#allocation3], %s562
        %s564 = sand.u32 %s216, 1
        %s565 = smul.addr %s564, 4
        %s566 = scalar_lea.vmem [#allocation2], %s565
        %s567 = sand.u32 %s246, 1
        %s568 = scalar_lea.sflag [#allocation5], %s567
        %s569 = sand.u32 %s246, 1
        %s570 = smul.addr %s569, 4
        %s571 = scalar_lea.vmem [#allocation4], %s570
        // Predicated region
        $region45: #{tpu_custom_call.1} parent=43 // pred_check
          %p572 = pneg %p226
        $region46: #{tpu_custom_call.1} parent=43 // pred_check_branch
          %574 = sbr.rel (%p572) target = $region48
        $region47: #{tpu_custom_call.1} parent=43 // pred_region
          %s576 = ssub.s32 64, 64
          %577 = vsyncadd %s563, %s576
          %s578 = sadd.s32 %s31, %s32
          %s579 = smul.addr %s30, 4
          %s580 = sadd.s32 %s578, %s579
          %s581 = smul.addr %s580, 64
          %s582 = scalar_lea.hbm %s6, %s581
          %s584 = sshll.u32 %s566, 4
          %s585 = int_to_ptr.vmem [resolvable:$true] %s584
          %587 = dma.vmem_to_hbm [thread:$0]  %s585, 64, %s582, %s563
        $region48: #{tpu_custom_call.1} parent=43 // pred_fallthru
          _
        // Predicated region
        $region49: #{tpu_custom_call.1} parent=43 // pred_check
          %p588 = pneg %p256
        $region50: #{tpu_custom_call.1} parent=43 // pred_check_branch
          %590 = sbr.rel (%p588) target = $region52
        $region51: #{tpu_custom_call.1} parent=43 // pred_region
          %s592 = ssub.s32 64, 64
          %593 = vsyncadd %s568, %s592
          %s594 = sadd.s32 %s31, %s32
          %s595 = smul.addr %s30, 4
          %s596 = sadd.s32 %s594, %s595
          %s597 = smul.addr %s596, 64
          %s598 = scalar_lea.hbm %s7, %s597
          %s600 = sshll.u32 %s571, 4
          %s601 = int_to_ptr.vmem [resolvable:$true] %s600
          %603 = dma.vmem_to_hbm [thread:$0]  %s601, 64, %s598, %s568
        $region52: #{tpu_custom_call.1} parent=43 // pred_fallthru
          _
      $region44: #{tpu_custom_call.1} parent=5 // pred_fallthru
        _
      %p604 = scmp.le.s32.totalorder 2, %s20
      // Predicated region
      $region53: #{tpu_custom_call.1} parent=5 // pred_check
        %p605 = pneg %p604
      $region54: #{tpu_custom_call.1} parent=5 // pred_check_branch
        %607 = sbr.rel (%p605) target = $region56
      $region55: #{tpu_custom_call.1} parent=5 // pred_region
        %s608 = ssub.s32 %s20, 2
        // Predicated region
        $region57: #{tpu_custom_call.1} parent=55 // pred_check
          %p609 = pneg %p232
        $region58: #{tpu_custom_call.1} parent=55 // pred_check_branch
          %611 = sbr.rel (%p609) target = $region60
        $region59: #{tpu_custom_call.1} parent=55 // pred_region
          %s612 = sand.u32 %s217, 1
          %s613 = scalar_lea.sflag [#allocation3], %s612
          %s614 = sand.u32 %s217, 1
          %s615 = smul.addr %s614, 4
          %s616 = scalar_lea.vmem [#allocation2], %s615
          %617 = dma.done %s613, 64
        $region60: #{tpu_custom_call.1} parent=55 // pred_fallthru
          _
        // Predicated region
        $region61: #{tpu_custom_call.1} parent=55 // pred_check
          %p618 = pneg %p262
        $region62: #{tpu_custom_call.1} parent=55 // pred_check_branch
          %620 = sbr.rel (%p618) target = $region64
        $region63: #{tpu_custom_call.1} parent=55 // pred_region
          %s621 = sand.u32 %s247, 1
          %s622 = scalar_lea.sflag [#allocation5], %s621
          %s623 = sand.u32 %s247, 1
          %s624 = smul.addr %s623, 4
          %s625 = scalar_lea.vmem [#allocation4], %s624
          %626 = dma.done %s622, 64
        $region64: #{tpu_custom_call.1} parent=55 // pred_fallthru
          _
      $region56: #{tpu_custom_call.1} parent=5 // pred_fallthru
        _
    $region6: #{tpu_custom_call.1} parent=1 // loop_footer
      %s24 = sadd.s32 1, %s20
    $region7: #{tpu_custom_call.1} parent=1 // loop_footer_branch
      %19 = sbr.rel target = $region3
    $region8: #{tpu_custom_call.1} parent=1 // loop_exit
      _
    %627 = vsyncpa [#allocation3], 1
    %s628 = scalar_lea.sflag [#allocation3], 1
    %629 = vsyncpa %s628, 1
    %630 = vsyncpa [#allocation5], 1
    %s631 = scalar_lea.sflag [#allocation5], 1
    %632 = vsyncpa %s631, 1

</llo_original>
